<compile_context>
chip_gen: v7x
topology: tpu7x:2x2x1
jax: 0.10.0
libtpu: 0.0.40
codegen_flags: <defaults>
</compile_context>

<pallas_src>
import functools

import jax
import jax.numpy as jnp
from jax import lax
from jax.experimental import pallas as pl
from jax.experimental.pallas import tpu as pltpu


def _round_up(x, m):
    return (x + m - 1) // m * m


# ----------------------------------------------------------------------------
# HBM row-gather kernel (chunked, double-buffered DMA).
# ----------------------------------------------------------------------------
def _line1st_gather_kernel(x1_ref, x2_ref, w_ref, emb_hbm, out_ref,
                           e1_buf, e2_buf, sems, *, batch, chunk):
    """One batch tile of TB rows, processed in chunks of `chunk` rows.

    x1_ref, x2_ref : SMEM (B_pad,) int32 node indices (scalar-prefetched)
    w_ref          : VMEM (TB, 1) f32 edge weights
    emb_hbm        : HBM  (N, E) f32 embedding table (raw ref, manual DMA)
    out_ref        : VMEM (TB, 1) f32 per-row -logsigmoid (padded rows -> 0)
    e1_buf, e2_buf : VMEM (2, C, E) f32 double-buffered gather scratch
    sems           : DMA semaphores (2, 2) = [buffer slot, which gather]
    """
    i = pl.program_id(0)
    TB = out_ref.shape[0]
    C = chunk
    num_chunks = TB // C
    base = i * TB

    def issue(c, slot):
        # 2*C row gathers for chunk c into buffer `slot`; all copies of one
        # buffer share a single DMA semaphore (waited per-copy below).
        @pl.loop(0, C)
        def _(r):
            row = base + c * C + r
            i1 = x1_ref[row]
            i2 = x2_ref[row]
            pltpu.make_async_copy(emb_hbm.at[i1], e1_buf.at[slot, r],
                                  sems.at[slot, 0]).start()
            pltpu.make_async_copy(emb_hbm.at[i2], e2_buf.at[slot, r],
                                  sems.at[slot, 1]).start()

    def wait(slot):
        # Per-copy waits on the shared semaphores; the descriptor only
        # supplies the per-row transfer size (source index is irrelevant).
        @pl.loop(0, C)
        def _(r):
            pltpu.make_async_copy(emb_hbm.at[0], e1_buf.at[slot, r],
                                  sems.at[slot, 0]).wait()
            pltpu.make_async_copy(emb_hbm.at[0], e2_buf.at[slot, r],
                                  sems.at[slot, 1]).wait()

    issue(0, 0)
    for c in range(num_chunks):              # static, small (TB // C)
        slot = c & 1
        if c + 1 < num_chunks:
            issue(c + 1, 1 - slot)           # overlap next chunk's gathers
        wait(slot)

        e1 = e1_buf[slot]                    # (C, E)
        e2 = e2_buf[slot]                    # (C, E)
        # TODO(synk): for E < 128, pack e1/e2 into one lane-dense (C, 2E)
        # buffer and reduce with pltpu.roll; compute is not the bottleneck.
        s = jnp.sum(e1 * e2, axis=1, keepdims=True)          # (C, 1)
        x = w_ref[pl.ds(c * C, C), :] * s                    # (C, 1)
        # -logsigmoid(x) == softplus(-x), numerically stable form.
        neg_ls = jnp.maximum(-x, 0.0) + jnp.log1p(jnp.exp(-jnp.abs(x)))
        # Zero padded rows (global row index >= batch).
        rows = lax.broadcasted_iota(jnp.int32, (C, 1), 0) + (base + c * C)
        out_ref[pl.ds(c * C, C), :] = jnp.where(rows < batch, neg_ls, 0.0)


# ----------------------------------------------------------------------------
# Small-table kernel: whole table resident in VMEM, one-hot MXU gather.
# ----------------------------------------------------------------------------
def _line1st_small_kernel(x1_ref, x2_ref, w_ref, emb_ref, out_ref, *, batch):
    i = pl.program_id(0)
    TB = out_ref.shape[0]
    N = emb_ref.shape[0]
    emb = emb_ref[...]                                       # (N, E)
    cols = lax.broadcasted_iota(jnp.int32, (TB, N), 1)
    oh1 = (x1_ref[...] == cols).astype(jnp.float32)          # (TB, N)
    oh2 = (x2_ref[...] == cols).astype(jnp.float32)
    e1 = jnp.dot(oh1, emb, preferred_element_type=jnp.float32)   # (TB, E)
    e2 = jnp.dot(oh2, emb, preferred_element_type=jnp.float32)
    s = jnp.sum(e1 * e2, axis=1, keepdims=True)              # (TB, 1)
    x = w_ref[...] * s
    neg_ls = jnp.maximum(-x, 0.0) + jnp.log1p(jnp.exp(-jnp.abs(x)))
    rows = lax.broadcasted_iota(jnp.int32, (TB, 1), 0) + i * TB
    out_ref[...] = jnp.where(rows < batch, neg_ls, 0.0)


# ----------------------------------------------------------------------------
# Wrapper
# ----------------------------------------------------------------------------
@functools.partial(jax.jit,
                   static_argnames=("tile_b", "chunk_b", "table_in_vmem"))
def line1st_loss(x1, x2, w, emb_table, *, tile_b=1024, chunk_b=128,
                 table_in_vmem=None):
    """x1, x2: (B,) int node ids; w: (B,) f32 edge weights; emb_table: (N,E)."""
    B = x1.shape[0]
    N, E = emb_table.shape
    assert chunk_b % 8 == 0 and tile_b % chunk_b == 0
    emb_table = emb_table.astype(jnp.float32)

    if table_in_vmem is None:
        # Small tables: skip per-row DMAs, gather via one-hot matmul instead.
        table_in_vmem = (N * E * 4 <= 512 * 1024) and (N <= 512)

    # Batch tile: as large as sensible (multiple of chunk_b), but keep >= 2
    # tiles when possible so both v7x TensorCores get work.
    TB = min(tile_b, _round_up(B, chunk_b))
    if B > chunk_b:
        TB = min(TB, _round_up(-(-B // 2), chunk_b))
    TB = _round_up(TB, chunk_b)
    C = min(chunk_b, TB)
    B_pad = _round_up(B, TB)
    num_tiles = B_pad // TB
    pad = B_pad - B

    # Clamp indices (HBM/VMEM refs have no runtime bounds check) and pad the
    # batch; padded rows (index 0, w = 0) are masked inside the kernels.
    x1_p = jnp.pad(jnp.clip(x1.astype(jnp.int32), 0, N - 1), (0, pad))
    x2_p = jnp.pad(jnp.clip(x2.astype(jnp.int32), 0, N - 1), (0, pad))
    w_p = jnp.pad(w.astype(jnp.float32), (0, pad)).reshape(B_pad, 1)

    if table_in_vmem:
        kernel = functools.partial(_line1st_small_kernel, batch=B)
        cost = pl.CostEstimate(
            flops=4 * B_pad * N * E + 4 * B_pad * E,
            transcendentals=2 * B_pad,
            bytes_accessed=N * E * 4 + 16 * B_pad)
        per_row = pl.pallas_call(
            kernel,
            out_shape=jax.ShapeDtypeStruct((B_pad, 1), jnp.float32),
            grid=(num_tiles,),
            in_specs=[
                pl.BlockSpec((TB, 1), lambda i: (i, 0)),     # x1 ids
                pl.BlockSpec((TB, 1), lambda i: (i, 0)),     # x2 ids
                pl.BlockSpec((TB, 1), lambda i: (i, 0)),     # w
                pl.BlockSpec((N, E), lambda i: (0, 0)),      # whole table
            ],
            out_specs=pl.BlockSpec((TB, 1), lambda i: (i, 0)),
            compiler_params=pltpu.CompilerParams(
                dimension_semantics=("parallel",),
                vmem_limit_bytes=32 * 1024 * 1024),
            cost_estimate=cost,
        )(x1_p.reshape(B_pad, 1), x2_p.reshape(B_pad, 1), w_p, emb_table)
    else:
        kernel = functools.partial(_line1st_gather_kernel, batch=B, chunk=C)
        cost = pl.CostEstimate(
            flops=4 * B_pad * E,
            transcendentals=2 * B_pad,
            bytes_accessed=2 * B_pad * E * 4 + 16 * B_pad)
        per_row = pl.pallas_call(
            kernel,
            out_shape=jax.ShapeDtypeStruct((B_pad, 1), jnp.float32),
            grid_spec=pltpu.PrefetchScalarGridSpec(
                num_scalar_prefetch=2,              # x1, x2 -> SMEM
                grid=(num_tiles,),
                in_specs=[
                    pl.BlockSpec((TB, 1), lambda i, x1r, x2r: (i, 0)),  # w
                    pl.BlockSpec(memory_space=pl.ANY),                  # table
                ],
                out_specs=pl.BlockSpec((TB, 1), lambda i, x1r, x2r: (i, 0)),
                scratch_shapes=[
                    pltpu.VMEM((2, C, E), jnp.float32),   # emb[x1] chunks
                    pltpu.VMEM((2, C, E), jnp.float32),   # emb[x2] chunks
                    pltpu.SemaphoreType.DMA((2, 2)),
                ],
            ),
            compiler_params=pltpu.CompilerParams(
                dimension_semantics=("parallel",),
                vmem_limit_bytes=32 * 1024 * 1024),
            cost_estimate=cost,
        )(x1_p, x2_p, w_p, emb_table)

    # TODO(synk): a per-tile scalar (SMEM) output would shave the last ~1.5%
    # of HBM traffic; per-row output kept for layout portability.
    return jnp.sum(per_row) / B


def _reference_loss(x1, x2, w, emb_table):
    e1 = emb_table[x1]
    e2 = emb_table[x2]
    x = w * jnp.sum(e1 * e2, axis=1)
    return jnp.mean(jax.nn.softplus(-x))   # -logsigmoid(x) == softplus(-x)


if __name__ == "__main__":
    num_nodes = 32
    emb_size = 64
    batch = 10            # not a multiple of the tile -> exercises pad + mask

    key = jax.random.PRNGKey(0)
    k_emb, k_x1, k_x2, k_w = jax.random.split(key, 4)

    emb_table = jax.random.normal(k_emb, (num_nodes, emb_size), jnp.float32) * 0.1
    x1 = jax.random.randint(k_x1, (batch,), 0, num_nodes, dtype=jnp.int32)
    x2 = jax.random.randint(k_x2, (batch,), 0, num_nodes, dtype=jnp.int32)
    w = jax.random.uniform(k_w, (batch,), jnp.float32, minval=0.5, maxval=2.0)

    ref = _reference_loss(x1, x2, w, emb_table)

    # Small-table (VMEM one-hot) fast path.
    loss_small = jax.block_until_ready(
        line1st_loss(x1, x2, w, emb_table, table_in_vmem=True))
    # Production HBM-gather path (chunked double-buffered row DMAs).
    loss_gather = jax.block_until_ready(
        line1st_loss(x1, x2, w, emb_table, table_in_vmem=False))

    assert jnp.allclose(loss_small, ref, rtol=1e-5, atol=1e-6), (loss_small, ref)
    assert jnp.allclose(loss_gather, ref, rtol=1e-5, atol=1e-6), (loss_gather, ref)

    print("KERNEL_OK")
</pallas_src>

<mosaic_0001>
module attributes {stable_mosaic.version = 11 : i64} {
  func.func @_line1st_small_kernel(%arg0: i32, %arg1: memref<128x1xi32, #tpu.memory_space<vmem>>, %arg2: memref<128x1xi32, #tpu.memory_space<vmem>>, %arg3: memref<128x1xf32, #tpu.memory_space<vmem>>, %arg4: memref<32x64xf32, #tpu.memory_space<vmem>>, %arg5: memref<128x1xf32, #tpu.memory_space<vmem>>) attributes {dimension_semantics = [#tpu.dimension_semantics<parallel>], iteration_bounds = array<i64: 1>, scalar_prefetch = 0 : i64, scratch_operands = 0 : i64, tpu.core_type = #tpu.core_type<tc>, window_params = [{transform_indices = @transform_0, window_bounds = array<i64: 128, 1>}, {transform_indices = @transform_1, window_bounds = array<i64: 128, 1>}, {transform_indices = @transform_2, window_bounds = array<i64: 128, 1>}, {pipeline_mode = #tpu.pipeline_mode<synchronous>, transform_indices = @transform_3, window_bounds = array<i64: 32, 64>}, {transform_indices = @transform_4, window_bounds = array<i64: 128, 1>}]} {
    %c0 = arith.constant 0 : index
    %c0_0 = arith.constant 0 : index
    %0 = vector.load %arg4[%c0, %c0_0] : memref<32x64xf32, #tpu.memory_space<vmem>>, vector<32x64xf32>
    %1 = tpu.iota {dimensions = array<i32: 1>} : vector<128x32xi32>
    %c0_1 = arith.constant 0 : index
    %c0_2 = arith.constant 0 : index
    %2 = vector.load %arg1[%c0_1, %c0_2] : memref<128x1xi32, #tpu.memory_space<vmem>>, vector<128x1xi32>
    %3 = vector.broadcast %2 : vector<128x1xi32> to vector<128x32xi32>
    %4 = arith.cmpi eq, %3, %1 : vector<128x32xi32>
    %5 = arith.extui %4 : vector<128x32xi1> to vector<128x32xi32>
    %6 = arith.sitofp %5 : vector<128x32xi32> to vector<128x32xf32>
    %c0_3 = arith.constant 0 : index
    %c0_4 = arith.constant 0 : index
    %7 = vector.load %arg2[%c0_3, %c0_4] : memref<128x1xi32, #tpu.memory_space<vmem>>, vector<128x1xi32>
    %8 = vector.broadcast %7 : vector<128x1xi32> to vector<128x32xi32>
    %9 = arith.cmpi eq, %8, %1 : vector<128x32xi32>
    %10 = arith.extui %9 : vector<128x32xi1> to vector<128x32xi32>
    %11 = arith.sitofp %10 : vector<128x32xi32> to vector<128x32xf32>
    %cst = arith.constant dense<0.000000e+00> : vector<128x64xf32>
    %12 = tpu.matmul %6, %0, %cst {dimension_numbers = #tpu.dot_dimension_numbers<[1], [0], [0], [1], [0, 0, 1, 1], [], []>} : vector<128x32xf32>, vector<32x64xf32>, vector<128x64xf32> -> vector<128x64xf32>
    %cst_5 = arith.constant dense<0.000000e+00> : vector<128x64xf32>
    %13 = tpu.matmul %11, %0, %cst_5 {dimension_numbers = #tpu.dot_dimension_numbers<[1], [0], [0], [1], [0, 0, 1, 1], [], []>} : vector<128x32xf32>, vector<32x64xf32>, vector<128x64xf32> -> vector<128x64xf32>
    %14 = arith.mulf %12, %13 : vector<128x64xf32>
    %cst_6 = arith.constant dense<0.000000e+00> : vector<128xf32>
    %15 = vector.multi_reduction <add>, %14, %cst_6 [1] : vector<128x64xf32> to vector<128xf32>
    %16 = vector.shape_cast %15 : vector<128xf32> to vector<128x1xf32>
    %c0_7 = arith.constant 0 : index
    %c0_8 = arith.constant 0 : index
    %17 = vector.load %arg3[%c0_7, %c0_8] : memref<128x1xf32, #tpu.memory_space<vmem>>, vector<128x1xf32>
    %18 = arith.mulf %17, %16 : vector<128x1xf32>
    %cst_9 = arith.constant 0.000000e+00 : f32
    %19 = vector.broadcast %cst_9 : f32 to vector<128x1xf32>
    %20 = arith.subf %19, %18 : vector<128x1xf32>
    %cst_10 = arith.constant 0.000000e+00 : f32
    %21 = vector.broadcast %cst_10 : f32 to vector<128x1xf32>
    %22 = arith.maximumf %20, %21 : vector<128x1xf32>
    %23 = math.absf %18 : vector<128x1xf32>
    %cst_11 = arith.constant 0.000000e+00 : f32
    %24 = vector.broadcast %cst_11 : f32 to vector<128x1xf32>
    %25 = arith.subf %24, %23 : vector<128x1xf32>
    %26 = math.exp %25 : vector<128x1xf32>
    %27 = math.log1p %26 : vector<128x1xf32>
    %28 = arith.addf %22, %27 : vector<128x1xf32>
    %29 = tpu.iota {dimensions = array<i32: 0>} : vector<128x1xi32>
    %c128_i32 = arith.constant 128 : i32
    %30 = arith.muli %arg0, %c128_i32 : i32
    %31 = vector.broadcast %30 : i32 to vector<128x1xi32>
    %32 = arith.addi %29, %31 : vector<128x1xi32>
    %c10_i32 = arith.constant 10 : i32
    %33 = vector.broadcast %c10_i32 : i32 to vector<128x1xi32>
    %34 = arith.cmpi slt, %32, %33 : vector<128x1xi32>
    %cst_12 = arith.constant 0.000000e+00 : f32
    %35 = vector.broadcast %cst_12 : f32 to vector<128x1xf32>
    %36 = arith.select %34, %28, %35 : vector<128x1xi1>, vector<128x1xf32>
    %c0_13 = arith.constant 0 : index
    %c0_14 = arith.constant 0 : index
    %37 = vector.load %arg5[%c0_13, %c0_14] : memref<128x1xf32, #tpu.memory_space<vmem>>, vector<128x1xf32>
    tpu.vector_store %arg5[%c0_13, %c0_14], %36 {strides = array<i32>} : memref<128x1xf32, #tpu.memory_space<vmem>>, vector<128x1xf32>,
    return
  }
  func.func @transform_0(%arg0: i32) -> (i32, i32) {
    %c0_i32 = arith.constant 0 : i32
    %c0_i32_0 = arith.constant 0 : i32
    return %arg0, %c0_i32 : i32, i32
  }
  func.func @transform_1(%arg0: i32) -> (i32, i32) {
    %c0_i32 = arith.constant 0 : i32
    %c0_i32_0 = arith.constant 0 : i32
    return %arg0, %c0_i32 : i32, i32
  }
  func.func @transform_2(%arg0: i32) -> (i32, i32) {
    %c0_i32 = arith.constant 0 : i32
    %c0_i32_0 = arith.constant 0 : i32
    return %arg0, %c0_i32 : i32, i32
  }
  func.func @transform_3(%arg0: i32) -> (i32, i32) {
    %c0_i32 = arith.constant 0 : i32
    %c0_i32_0 = arith.constant 0 : i32
    %c0_i32_1 = arith.constant 0 : i32
    return %c0_i32, %c0_i32_0 : i32, i32
  }
  func.func @transform_4(%arg0: i32) -> (i32, i32) {
    %c0_i32 = arith.constant 0 : i32
    %c0_i32_0 = arith.constant 0 : i32
    return %arg0, %c0_i32 : i32, i32
  }
}

</mosaic_0001>

<llo_original>
// kernel: line1st_loss.1
$region0: #{line1st_loss.1}
  #allocation0 [shape = 'u32[]', space=smem, size = 0x4, offset = 0x4, fixed_abs, tag = 'smem constant byte address 0x4 - core index']
  #allocation1 [shape = 'u32[144,128]{1,0:T(1,128)}', space=vmem, size = 0x12000, scoped, tag = 'internal scratch']
  %s0 = inlined_call_operand.vmem [shape: s32[128,1], index: 0, kind: input, shape index: {}]
  %s1 = inlined_call_operand.vmem [shape: s32[128,1], index: 1, kind: input, shape index: {}]
  %s2 = inlined_call_operand.vmem [shape: f32[128,1], index: 2, kind: input, shape index: {}]
  %s3 = inlined_call_operand.vmem [shape: f32[32,64], index: 3, kind: input, shape index: {}]
  %s4 = inlined_call_operand.vmem [shape: f32[128,1], index: 4, kind: output, shape index: {}]
  %s5 = sld [smem:[#allocation0]]
  $region26: #{line1st_loss.1} parent=0
    _
  %s7 = ssub.s32 1, %s5
  %s8 = scalar_select 0, %s7, %s5
  // Predicated region
  $region2: #{line1st_loss.1} parent=0 // pred_check
    _
  $region3: #{line1st_loss.1} parent=0 // pred_check_branch
    %10 = sbr.rel (0) target = $region5
  $region4: #{line1st_loss.1} parent=0 // pred_region
    _
  $region5: #{line1st_loss.1} parent=0 // pred_fallthru
    _
  // Predicated region
  $region6: #{line1st_loss.1} parent=0 // pred_check
    _
  $region7: #{line1st_loss.1} parent=0 // pred_check_branch
    %12 = sbr.rel (0) target = $region9
  $region8: #{line1st_loss.1} parent=0 // pred_region
    _
  $region9: #{line1st_loss.1} parent=0 // pred_fallthru
    _
  // Predicated region
  $region10: #{line1st_loss.1} parent=0 // pred_check
    _
  $region11: #{line1st_loss.1} parent=0 // pred_check_branch
    %14 = sbr.rel (0) target = $region13
  $region12: #{line1st_loss.1} parent=0 // pred_region
    _
  $region13: #{line1st_loss.1} parent=0 // pred_fallthru
    _
  // Predicated region
  $region14: #{line1st_loss.1} parent=0 // pred_check
    _
  $region15: #{line1st_loss.1} parent=0 // pred_check_branch
    %16 = sbr.rel (0) target = $region17
  $region16: #{line1st_loss.1} parent=0 // pred_region
    _
  $region17: #{line1st_loss.1} parent=0 // pred_fallthru
    _
  %v17 = vld [vmem:[%s3] sm:$0xff]
  %v18 = vld [vmem:[%s3 + $0x8] sm:$0xff]
  %v19 = vld [vmem:[%s3 + $0x10] sm:$0xff]
  %v20 = vld [vmem:[%s3 + $0x18] sm:$0xff]
  %v21 = vlaneseq
  %v22 = vand.u32 %v21, 127
  %v23 = vld [vmem:[%s0] sm:$0xff]
  %v24 = vld [vmem:[%s0 + $0x8] sm:$0xff]
  %v25 = vld [vmem:[%s0 + $0x10] sm:$0xff]
  %v26 = vld [vmem:[%s0 + $0x18] sm:$0xff]
  %v27 = vld [vmem:[%s0 + $0x20] sm:$0xff]
  %v28 = vld [vmem:[%s0 + $0x28] sm:$0xff]
  %v29 = vld [vmem:[%s0 + $0x30] sm:$0xff]
  %v30 = vld [vmem:[%s0 + $0x38] sm:$0xff]
  %v31 = vld [vmem:[%s0 + $0x40] sm:$0xff]
  %v32 = vld [vmem:[%s0 + $0x48] sm:$0xff]
  %v33 = vld [vmem:[%s0 + $0x50] sm:$0xff]
  %v34 = vld [vmem:[%s0 + $0x58] sm:$0xff]
  %v35 = vld [vmem:[%s0 + $0x60] sm:$0xff]
  %v36 = vld [vmem:[%s0 + $0x68] sm:$0xff]
  %v37 = vld [vmem:[%s0 + $0x70] sm:$0xff]
  %v38 = vld [vmem:[%s0 + $0x78] sm:$0xff]
  %39 = vset.pattern.permute.xlu0 0
  %40 = vperm.xlu0 %39, %v23
  %v41 = vpop.permute.xlu0 %40
  %42 = vset.pattern.permute.xlu0 0
  %43 = vperm.xlu0 %42, %v24
  %v44 = vpop.permute.xlu0 %43
  %45 = vset.pattern.permute.xlu0 0
  %46 = vperm.xlu0 %45, %v25
  %v47 = vpop.permute.xlu0 %46
  %48 = vset.pattern.permute.xlu0 0
  %49 = vperm.xlu0 %48, %v26
  %v50 = vpop.permute.xlu0 %49
  %51 = vset.pattern.permute.xlu0 0
  %52 = vperm.xlu0 %51, %v27
  %v53 = vpop.permute.xlu0 %52
  %54 = vset.pattern.permute.xlu0 0
  %55 = vperm.xlu0 %54, %v28
  %v56 = vpop.permute.xlu0 %55
  %57 = vset.pattern.permute.xlu0 0
  %58 = vperm.xlu0 %57, %v29
  %v59 = vpop.permute.xlu0 %58
  %60 = vset.pattern.permute.xlu0 0
  %61 = vperm.xlu0 %60, %v30
  %v62 = vpop.permute.xlu0 %61
  %63 = vset.pattern.permute.xlu0 0
  %64 = vperm.xlu0 %63, %v31
  %v65 = vpop.permute.xlu0 %64
  %66 = vset.pattern.permute.xlu0 0
  %67 = vperm.xlu0 %66, %v32
  %v68 = vpop.permute.xlu0 %67
  %69 = vset.pattern.permute.xlu0 0
  %70 = vperm.xlu0 %69, %v33
  %v71 = vpop.permute.xlu0 %70
  %72 = vset.pattern.permute.xlu0 0
  %73 = vperm.xlu0 %72, %v34
  %v74 = vpop.permute.xlu0 %73
  %75 = vset.pattern.permute.xlu0 0
  %76 = vperm.xlu0 %75, %v35
  %v77 = vpop.permute.xlu0 %76
  %78 = vset.pattern.permute.xlu0 0
  %79 = vperm.xlu0 %78, %v36
  %v80 = vpop.permute.xlu0 %79
  %81 = vset.pattern.permute.xlu0 0
  %82 = vperm.xlu0 %81, %v37
  %v83 = vpop.permute.xlu0 %82
  %84 = vset.pattern.permute.xlu0 0
  %85 = vperm.xlu0 %84, %v38
  %v86 = vpop.permute.xlu0 %85
  %vm87 = vcmp.eq.s32.totalorder %v41, %v22
  %vm88 = vcmp.eq.s32.totalorder %v44, %v22
  %vm89 = vcmp.eq.s32.totalorder %v47, %v22
  %vm90 = vcmp.eq.s32.totalorder %v50, %v22
  %vm91 = vcmp.eq.s32.totalorder %v53, %v22
  %vm92 = vcmp.eq.s32.totalorder %v56, %v22
  %vm93 = vcmp.eq.s32.totalorder %v59, %v22
  %vm94 = vcmp.eq.s32.totalorder %v62, %v22
  %vm95 = vcmp.eq.s32.totalorder %v65, %v22
  %vm96 = vcmp.eq.s32.totalorder %v68, %v22
  %vm97 = vcmp.eq.s32.totalorder %v71, %v22
  %vm98 = vcmp.eq.s32.totalorder %v74, %v22
  %vm99 = vcmp.eq.s32.totalorder %v77, %v22
  %vm100 = vcmp.eq.s32.totalorder %v80, %v22
  %vm101 = vcmp.eq.s32.totalorder %v83, %v22
  %vm102 = vcmp.eq.s32.totalorder %v86, %v22
  %v103 = vsel %vm87, 1, 0
  %v104 = vsel %vm88, 1, 0
  %v105 = vsel %vm89, 1, 0
  %v106 = vsel %vm90, 1, 0
  %v107 = vsel %vm91, 1, 0
  %v108 = vsel %vm92, 1, 0
  %v109 = vsel %vm93, 1, 0
  %v110 = vsel %vm94, 1, 0
  %v111 = vsel %vm95, 1, 0
  %v112 = vsel %vm96, 1, 0
  %v113 = vsel %vm97, 1, 0
  %v114 = vsel %vm98, 1, 0
  %v115 = vsel %vm99, 1, 0
  %v116 = vsel %vm100, 1, 0
  %v117 = vsel %vm101, 1, 0
  %v118 = vsel %vm102, 1, 0
  %v119 = vcvt.s32.f32 %v103
  %v120 = vcvt.s32.f32 %v104
  %v121 = vcvt.s32.f32 %v105
  %v122 = vcvt.s32.f32 %v106
  %v123 = vcvt.s32.f32 %v107
  %v124 = vcvt.s32.f32 %v108
  %v125 = vcvt.s32.f32 %v109
  %v126 = vcvt.s32.f32 %v110
  %v127 = vcvt.s32.f32 %v111
  %v128 = vcvt.s32.f32 %v112
  %v129 = vcvt.s32.f32 %v113
  %v130 = vcvt.s32.f32 %v114
  %v131 = vcvt.s32.f32 %v115
  %v132 = vcvt.s32.f32 %v116
  %v133 = vcvt.s32.f32 %v117
  %v134 = vcvt.s32.f32 %v118
  %v135 = vld [vmem:[%s1] sm:$0xff]
  %v136 = vld [vmem:[%s1 + $0x8] sm:$0xff]
  %v137 = vld [vmem:[%s1 + $0x10] sm:$0xff]
  %v138 = vld [vmem:[%s1 + $0x18] sm:$0xff]
  %v139 = vld [vmem:[%s1 + $0x20] sm:$0xff]
  %v140 = vld [vmem:[%s1 + $0x28] sm:$0xff]
  %v141 = vld [vmem:[%s1 + $0x30] sm:$0xff]
  %v142 = vld [vmem:[%s1 + $0x38] sm:$0xff]
  %v143 = vld [vmem:[%s1 + $0x40] sm:$0xff]
  %v144 = vld [vmem:[%s1 + $0x48] sm:$0xff]
  %v145 = vld [vmem:[%s1 + $0x50] sm:$0xff]
  %v146 = vld [vmem:[%s1 + $0x58] sm:$0xff]
  %v147 = vld [vmem:[%s1 + $0x60] sm:$0xff]
  %v148 = vld [vmem:[%s1 + $0x68] sm:$0xff]
  %v149 = vld [vmem:[%s1 + $0x70] sm:$0xff]
  %v150 = vld [vmem:[%s1 + $0x78] sm:$0xff]
  %151 = vset.pattern.permute.xlu0 0
  %152 = vperm.xlu0 %151, %v135
  %v153 = vpop.permute.xlu0 %152
  %154 = vset.pattern.permute.xlu0 0
  %155 = vperm.xlu0 %154, %v136
  %v156 = vpop.permute.xlu0 %155
  %157 = vset.pattern.permute.xlu0 0
  %158 = vperm.xlu0 %157, %v137
  %v159 = vpop.permute.xlu0 %158
  %160 = vset.pattern.permute.xlu0 0
  %161 = vperm.xlu0 %160, %v138
  %v162 = vpop.permute.xlu0 %161
  %163 = vset.pattern.permute.xlu0 0
  %164 = vperm.xlu0 %163, %v139
  %v165 = vpop.permute.xlu0 %164
  %166 = vset.pattern.permute.xlu0 0
  %167 = vperm.xlu0 %166, %v140
  %v168 = vpop.permute.xlu0 %167
  %169 = vset.pattern.permute.xlu0 0
  %170 = vperm.xlu0 %169, %v141
  %v171 = vpop.permute.xlu0 %170
  %172 = vset.pattern.permute.xlu0 0
  %173 = vperm.xlu0 %172, %v142
  %v174 = vpop.permute.xlu0 %173
  %175 = vset.pattern.permute.xlu0 0
  %176 = vperm.xlu0 %175, %v143
  %v177 = vpop.permute.xlu0 %176
  %178 = vset.pattern.permute.xlu0 0
  %179 = vperm.xlu0 %178, %v144
  %v180 = vpop.permute.xlu0 %179
  %181 = vset.pattern.permute.xlu0 0
  %182 = vperm.xlu0 %181, %v145
  %v183 = vpop.permute.xlu0 %182
  %184 = vset.pattern.permute.xlu0 0
  %185 = vperm.xlu0 %184, %v146
  %v186 = vpop.permute.xlu0 %185
  %187 = vset.pattern.permute.xlu0 0
  %188 = vperm.xlu0 %187, %v147
  %v189 = vpop.permute.xlu0 %188
  %190 = vset.pattern.permute.xlu0 0
  %191 = vperm.xlu0 %190, %v148
  %v192 = vpop.permute.xlu0 %191
  %193 = vset.pattern.permute.xlu0 0
  %194 = vperm.xlu0 %193, %v149
  %v195 = vpop.permute.xlu0 %194
  %196 = vset.pattern.permute.xlu0 0
  %197 = vperm.xlu0 %196, %v150
  %v198 = vpop.permute.xlu0 %197
  %vm199 = vcmp.eq.s32.totalorder %v153, %v22
  %vm200 = vcmp.eq.s32.totalorder %v156, %v22
  %vm201 = vcmp.eq.s32.totalorder %v159, %v22
  %vm202 = vcmp.eq.s32.totalorder %v162, %v22
  %vm203 = vcmp.eq.s32.totalorder %v165, %v22
  %vm204 = vcmp.eq.s32.totalorder %v168, %v22
  %vm205 = vcmp.eq.s32.totalorder %v171, %v22
  %vm206 = vcmp.eq.s32.totalorder %v174, %v22
  %vm207 = vcmp.eq.s32.totalorder %v177, %v22
  %vm208 = vcmp.eq.s32.totalorder %v180, %v22
  %vm209 = vcmp.eq.s32.totalorder %v183, %v22
  %vm210 = vcmp.eq.s32.totalorder %v186, %v22
  %vm211 = vcmp.eq.s32.totalorder %v189, %v22
  %vm212 = vcmp.eq.s32.totalorder %v192, %v22
  %vm213 = vcmp.eq.s32.totalorder %v195, %v22
  %vm214 = vcmp.eq.s32.totalorder %v198, %v22
  %v215 = vsel %vm199, 1, 0
  %v216 = vsel %vm200, 1, 0
  %v217 = vsel %vm201, 1, 0
  %v218 = vsel %vm202, 1, 0
  %v219 = vsel %vm203, 1, 0
  %v220 = vsel %vm204, 1, 0
  %v221 = vsel %vm205, 1, 0
  %v222 = vsel %vm206, 1, 0
  %v223 = vsel %vm207, 1, 0
  %v224 = vsel %vm208, 1, 0
  %v225 = vsel %vm209, 1, 0
  %v226 = vsel %vm210, 1, 0
  %v227 = vsel %vm211, 1, 0
  %v228 = vsel %vm212, 1, 0
  %v229 = vsel %vm213, 1, 0
  %v230 = vsel %vm214, 1, 0
  %v231 = vcvt.s32.f32 %v215
  %v232 = vcvt.s32.f32 %v216
  %v233 = vcvt.s32.f32 %v217
  %v234 = vcvt.s32.f32 %v218
  %v235 = vcvt.s32.f32 %v219
  %v236 = vcvt.s32.f32 %v220
  %v237 = vcvt.s32.f32 %v221
  %v238 = vcvt.s32.f32 %v222
  %v239 = vcvt.s32.f32 %v223
  %v240 = vcvt.s32.f32 %v224
  %v241 = vcvt.s32.f32 %v225
  %v242 = vcvt.s32.f32 %v226
  %v243 = vcvt.s32.f32 %v227
  %v244 = vcvt.s32.f32 %v228
  %v245 = vcvt.s32.f32 %v229
  %v246 = vcvt.s32.f32 %v230
  %vm247 = vcmask 261120
  %v249 = vsel %vm247, %v119, 0
  %v252 = vsel %vm247, %v120, 0
  %v255 = vsel %vm247, %v121, 0
  %v258 = vsel %vm247, %v122, 0
  %v261 = vsel %vm247, %v123, 0
  %v264 = vsel %vm247, %v124, 0
  %v267 = vsel %vm247, %v125, 0
  %v270 = vsel %vm247, %v126, 0
  %v273 = vsel %vm247, %v127, 0
  %v276 = vsel %vm247, %v128, 0
  %v279 = vsel %vm247, %v129, 0
  %v282 = vsel %vm247, %v130, 0
  %v285 = vsel %vm247, %v131, 0
  %v288 = vsel %vm247, %v132, 0
  %v291 = vsel %vm247, %v133, 0
  %v294 = vsel %vm247, %v134, 0
  %296 = vmatprep.subr.mxu0 0.0
  %297 = vmatpush1.msra.mxu0 %v17
  %298 = vmatprep.subr.mxu0 0.0
  %299 = vmatpush1.msra.mxu0 %v18
  %300 = vmatprep.subr.mxu0 0.0
  %301 = vmatpush1.msra.mxu0 %v19
  %302 = vmatprep.subr.mxu0 0.0
  %303 = vmatpush1.msra.mxu0 %v20
  %304 = vmatprep.subr.mxu0 0.0
  %305 = vmatpush1.msra.mxu0 0.0
  %306 = vmatprep.subr.mxu0 0.0
  %307 = vmatpush1.msra.mxu0 0.0
  %308 = vmatprep.subr.mxu0 0.0
  %309 = vmatpush1.msra.mxu0 0.0
  %310 = vmatprep.subr.mxu0 0.0
  %311 = vmatpush1.msra.mxu0 0.0
  %312 = vmatprep.subr.mxu0 0.0
  %313 = vmatpush1.msra.mxu0 0.0
  %314 = vmatprep.subr.mxu0 0.0
  %315 = vmatpush1.msra.mxu0 0.0
  %316 = vmatprep.subr.mxu0 0.0
  %317 = vmatpush1.msra.mxu0 0.0
  %318 = vmatprep.subr.mxu0 0.0
  %319 = vmatpush1.msra.mxu0 0.0
  %320 = vmatprep.subr.mxu0 0.0
  %321 = vmatpush1.msra.mxu0 0.0
  %322 = vmatprep.subr.mxu0 0.0
  %323 = vmatpush1.msra.mxu0 0.0
  %324 = vmatprep.subr.mxu0 0.0
  %325 = vmatpush1.msra.mxu0 0.0
  %326 = vmatprep.subr.mxu0 0.0
  %327 = vmatpush1.msra.mxu0 0.0
  %328 = vmatprep.subr.mxu0 0.0
  %329 = vmatpush1.msra.mxu0 0.0
  %330 = vmatprep.subr.mxu0 0.0
  %331 = vmatpush1.msra.mxu0 0.0
  %332 = vmatprep.subr.mxu0 0.0
  %333 = vmatpush1.msra.mxu0 0.0
  %334 = vmatprep.subr.mxu0 0.0
  %335 = vmatpush1.msra.mxu0 0.0
  %336 = vmatprep.subr.mxu0 0.0
  %337 = vmatpush1.msra.mxu0 0.0
  %338 = vmatprep.subr.mxu0 0.0
  %339 = vmatpush1.msra.mxu0 0.0
  %340 = vmatprep.subr.mxu0 0.0
  %341 = vmatpush1.msra.mxu0 0.0
  %342 = vmatprep.subr.mxu0 0.0
  %343 = vmatpush1.msra.mxu0 0.0
  %344 = vmatprep.subr.mxu0 0.0
  %345 = vmatpush1.msra.mxu0 0.0
  %346 = vmatprep.subr.mxu0 0.0
  %347 = vmatpush1.msra.mxu0 0.0
  %348 = vmatprep.subr.mxu0 0.0
  %349 = vmatpush1.msra.mxu0 0.0
  %350 = vmatprep.subr.mxu0 0.0
  %351 = vmatpush1.msra.mxu0 0.0
  %352 = vmatprep.subr.mxu0 0.0
  %353 = vmatpush1.msra.mxu0 0.0
  %354 = vmatprep.subr.mxu0 0.0
  %355 = vmatpush1.msra.mxu0 0.0
  %356 = vmatprep.subr.mxu0 0.0
  %357 = vmatpush1.msra.mxu0 0.0
  %358 = vmatprep.subr.mxu0 0.0
  %359 = vmatpush1.msra.mxu0 0.0
  %360 = vmatprep.mubr.f32.mxu0 0.0
  %361 = vmatmul.mubr.f32.gmra.mrb[0].mxu0 %v249
  %v362 = vpop.f32.mrb[0].mxu0
  %v363 = vadd.f32 0.0, %v362
  %v364 = vpop.f32.mrb[0].mxu0
  %365 = vmatprep.mubr.f32.mxu0 0.0
  %366 = vmatmul.mubr.f32.gmra.mrb[0].mxu0 %v252
  %v367 = vpop.f32.mrb[0].mxu0
  %v368 = vadd.f32 0.0, %v367
  %v369 = vpop.f32.mrb[0].mxu0
  %370 = vmatprep.mubr.f32.mxu0 0.0
  %371 = vmatmul.mubr.f32.gmra.mrb[0].mxu0 %v255
  %v372 = vpop.f32.mrb[0].mxu0
  %v373 = vadd.f32 0.0, %v372
  %v374 = vpop.f32.mrb[0].mxu0
  %375 = vmatprep.mubr.f32.mxu0 0.0
  %376 = vmatmul.mubr.f32.gmra.mrb[0].mxu0 %v258
  %v377 = vpop.f32.mrb[0].mxu0
  %v378 = vadd.f32 0.0, %v377
  %v379 = vpop.f32.mrb[0].mxu0
  %380 = vmatprep.mubr.f32.mxu0 0.0
  %381 = vmatmul.mubr.f32.gmra.mrb[0].mxu0 %v261
  %v382 = vpop.f32.mrb[0].mxu0
  %v383 = vadd.f32 0.0, %v382
  %v384 = vpop.f32.mrb[0].mxu0
  %385 = vmatprep.mubr.f32.mxu0 0.0
  %386 = vmatmul.mubr.f32.gmra.mrb[0].mxu0 %v264
  %v387 = vpop.f32.mrb[0].mxu0
  %v388 = vadd.f32 0.0, %v387
  %v389 = vpop.f32.mrb[0].mxu0
  %390 = vmatprep.mubr.f32.mxu0 0.0
  %391 = vmatmul.mubr.f32.gmra.mrb[0].mxu0 %v267
  %v392 = vpop.f32.mrb[0].mxu0
  %v393 = vadd.f32 0.0, %v392
  %v394 = vpop.f32.mrb[0].mxu0
  %395 = vmatprep.mubr.f32.mxu0 0.0
  %396 = vmatmul.mubr.f32.gmra.mrb[0].mxu0 %v270
  %v397 = vpop.f32.mrb[0].mxu0
  %v398 = vadd.f32 0.0, %v397
  %v399 = vpop.f32.mrb[0].mxu0
  %400 = vmatprep.mubr.f32.mxu0 0.0
  %401 = vmatmul.mubr.f32.gmra.mrb[0].mxu0 %v273
  %v402 = vpop.f32.mrb[0].mxu0
  %v403 = vadd.f32 0.0, %v402
  %v404 = vpop.f32.mrb[0].mxu0
  %405 = vmatprep.mubr.f32.mxu0 0.0
  %406 = vmatmul.mubr.f32.gmra.mrb[0].mxu0 %v276
  %v407 = vpop.f32.mrb[0].mxu0
  %v408 = vadd.f32 0.0, %v407
  %v409 = vpop.f32.mrb[0].mxu0
  %410 = vmatprep.mubr.f32.mxu0 0.0
  %411 = vmatmul.mubr.f32.gmra.mrb[0].mxu0 %v279
  %v412 = vpop.f32.mrb[0].mxu0
  %v413 = vadd.f32 0.0, %v412
  %v414 = vpop.f32.mrb[0].mxu0
  %415 = vmatprep.mubr.f32.mxu0 0.0
  %416 = vmatmul.mubr.f32.gmra.mrb[0].mxu0 %v282
  %v417 = vpop.f32.mrb[0].mxu0
  %v418 = vadd.f32 0.0, %v417
  %v419 = vpop.f32.mrb[0].mxu0
  %420 = vmatprep.mubr.f32.mxu0 0.0
  %421 = vmatmul.mubr.f32.gmra.mrb[0].mxu0 %v285
  %v422 = vpop.f32.mrb[0].mxu0
  %v423 = vadd.f32 0.0, %v422
  %v424 = vpop.f32.mrb[0].mxu0
  %425 = vmatprep.mubr.f32.mxu0 0.0
  %426 = vmatmul.mubr.f32.gmra.mrb[0].mxu0 %v288
  %v427 = vpop.f32.mrb[0].mxu0
  %v428 = vadd.f32 0.0, %v427
  %v429 = vpop.f32.mrb[0].mxu0
  %430 = vmatprep.mubr.f32.mxu0 0.0
  %431 = vmatmul.mubr.f32.gmra.mrb[0].mxu0 %v291
  %v432 = vpop.f32.mrb[0].mxu0
  %v433 = vadd.f32 0.0, %v432
  %v434 = vpop.f32.mrb[0].mxu0
  %435 = vmatprep.mubr.f32.mxu0 0.0
  %436 = vmatmul.mubr.f32.gmra.mrb[0].mxu0 %v294
  %v437 = vpop.f32.mrb[0].mxu0
  %v438 = vadd.f32 0.0, %v437
  %v439 = vpop.f32.mrb[0].mxu0
  %440 = vdwg.mxu0
  %v442 = vsel %vm247, %v231, 0
  %v445 = vsel %vm247, %v232, 0
  %v448 = vsel %vm247, %v233, 0
  %v451 = vsel %vm247, %v234, 0
  %v454 = vsel %vm247, %v235, 0
  %v457 = vsel %vm247, %v236, 0
  %v460 = vsel %vm247, %v237, 0
  %v463 = vsel %vm247, %v238, 0
  %v466 = vsel %vm247, %v239, 0
  %v469 = vsel %vm247, %v240, 0
  %v472 = vsel %vm247, %v241, 0
  %v475 = vsel %vm247, %v242, 0
  %v478 = vsel %vm247, %v243, 0
  %v481 = vsel %vm247, %v244, 0
  %v484 = vsel %vm247, %v245, 0
  %v487 = vsel %vm247, %v246, 0
  %489 = vmatprep.subr.mxu0 0.0
  %490 = vmatpush1.msra.mxu0 %v17
  %491 = vmatprep.subr.mxu0 0.0
  %492 = vmatpush1.msra.mxu0 %v18
  %493 = vmatprep.subr.mxu0 0.0
  %494 = vmatpush1.msra.mxu0 %v19
  %495 = vmatprep.subr.mxu0 0.0
  %496 = vmatpush1.msra.mxu0 %v20
  %497 = vmatprep.subr.mxu0 0.0
  %498 = vmatpush1.msra.mxu0 0.0
  %499 = vmatprep.subr.mxu0 0.0
  %500 = vmatpush1.msra.mxu0 0.0
  %501 = vmatprep.subr.mxu0 0.0
  %502 = vmatpush1.msra.mxu0 0.0
  %503 = vmatprep.subr.mxu0 0.0
  %504 = vmatpush1.msra.mxu0 0.0
  %505 = vmatprep.subr.mxu0 0.0
  %506 = vmatpush1.msra.mxu0 0.0
  %507 = vmatprep.subr.mxu0 0.0
  %508 = vmatpush1.msra.mxu0 0.0
  %509 = vmatprep.subr.mxu0 0.0
  %510 = vmatpush1.msra.mxu0 0.0
  %511 = vmatprep.subr.mxu0 0.0
  %512 = vmatpush1.msra.mxu0 0.0
  %513 = vmatprep.subr.mxu0 0.0
  %514 = vmatpush1.msra.mxu0 0.0
  %515 = vmatprep.subr.mxu0 0.0
  %516 = vmatpush1.msra.mxu0 0.0
  %517 = vmatprep.subr.mxu0 0.0
  %518 = vmatpush1.msra.mxu0 0.0
  %519 = vmatprep.subr.mxu0 0.0
  %520 = vmatpush1.msra.mxu0 0.0
  %521 = vmatprep.subr.mxu0 0.0
  %522 = vmatpush1.msra.mxu0 0.0
  %523 = vmatprep.subr.mxu0 0.0
  %524 = vmatpush1.msra.mxu0 0.0
  %525 = vmatprep.subr.mxu0 0.0
  %526 = vmatpush1.msra.mxu0 0.0
  %527 = vmatprep.subr.mxu0 0.0
  %528 = vmatpush1.msra.mxu0 0.0
  %529 = vmatprep.subr.mxu0 0.0
  %530 = vmatpush1.msra.mxu0 0.0
  %531 = vmatprep.subr.mxu0 0.0
  %532 = vmatpush1.msra.mxu0 0.0
  %533 = vmatprep.subr.mxu0 0.0
  %534 = vmatpush1.msra.mxu0 0.0
  %535 = vmatprep.subr.mxu0 0.0
  %536 = vmatpush1.msra.mxu0 0.0
  %537 = vmatprep.subr.mxu0 0.0
  %538 = vmatpush1.msra.mxu0 0.0
  %539 = vmatprep.subr.mxu0 0.0
  %540 = vmatpush1.msra.mxu0 0.0
  %541 = vmatprep.subr.mxu0 0.0
  %542 = vmatpush1.msra.mxu0 0.0
  %543 = vmatprep.subr.mxu0 0.0
  %544 = vmatpush1.msra.mxu0 0.0
  %545 = vmatprep.subr.mxu0 0.0
  %546 = vmatpush1.msra.mxu0 0.0
  %547 = vmatprep.subr.mxu0 0.0
  %548 = vmatpush1.msra.mxu0 0.0
  %549 = vmatprep.subr.mxu0 0.0
  %550 = vmatpush1.msra.mxu0 0.0
  %551 = vmatprep.subr.mxu0 0.0
  %552 = vmatpush1.msra.mxu0 0.0
  %553 = vmatprep.mubr.f32.mxu0 0.0
  %554 = vmatmul.mubr.f32.gmra.mrb[0].mxu0 %v442
  %v555 = vpop.f32.mrb[0].mxu0
  %v556 = vadd.f32 0.0, %v555
  %v557 = vpop.f32.mrb[0].mxu0
  %558 = vmatprep.mubr.f32.mxu0 0.0
  %559 = vmatmul.mubr.f32.gmra.mrb[0].mxu0 %v445
  %v560 = vpop.f32.mrb[0].mxu0
  %v561 = vadd.f32 0.0, %v560
  %v562 = vpop.f32.mrb[0].mxu0
  %563 = vmatprep.mubr.f32.mxu0 0.0
  %564 = vmatmul.mubr.f32.gmra.mrb[0].mxu0 %v448
  %v565 = vpop.f32.mrb[0].mxu0
  %v566 = vadd.f32 0.0, %v565
  %v567 = vpop.f32.mrb[0].mxu0
  %568 = vmatprep.mubr.f32.mxu0 0.0
  %569 = vmatmul.mubr.f32.gmra.mrb[0].mxu0 %v451
  %v570 = vpop.f32.mrb[0].mxu0
  %v571 = vadd.f32 0.0, %v570
  %v572 = vpop.f32.mrb[0].mxu0
  %573 = vmatprep.mubr.f32.mxu0 0.0
  %574 = vmatmul.mubr.f32.gmra.mrb[0].mxu0 %v454
  %v575 = vpop.f32.mrb[0].mxu0
  %v576 = vadd.f32 0.0, %v575
  %v577 = vpop.f32.mrb[0].mxu0
  %578 = vmatprep.mubr.f32.mxu0 0.0
  %579 = vmatmul.mubr.f32.gmra.mrb[0].mxu0 %v457
  %v580 = vpop.f32.mrb[0].mxu0
  %v581 = vadd.f32 0.0, %v580
  %v582 = vpop.f32.mrb[0].mxu0
  %583 = vmatprep.mubr.f32.mxu0 0.0
  %584 = vmatmul.mubr.f32.gmra.mrb[0].mxu0 %v460
  %v585 = vpop.f32.mrb[0].mxu0
  %v586 = vadd.f32 0.0, %v585
  %v587 = vpop.f32.mrb[0].mxu0
  %588 = vmatprep.mubr.f32.mxu0 0.0
  %589 = vmatmul.mubr.f32.gmra.mrb[0].mxu0 %v463
  %v590 = vpop.f32.mrb[0].mxu0
  %v591 = vadd.f32 0.0, %v590
  %v592 = vpop.f32.mrb[0].mxu0
  %593 = vmatprep.mubr.f32.mxu0 0.0
  %594 = vmatmul.mubr.f32.gmra.mrb[0].mxu0 %v466
  %v595 = vpop.f32.mrb[0].mxu0
  %v596 = vadd.f32 0.0, %v595
  %v597 = vpop.f32.mrb[0].mxu0
  %598 = vmatprep.mubr.f32.mxu0 0.0
  %599 = vmatmul.mubr.f32.gmra.mrb[0].mxu0 %v469
  %v600 = vpop.f32.mrb[0].mxu0
  %v601 = vadd.f32 0.0, %v600
  %v602 = vpop.f32.mrb[0].mxu0
  %603 = vmatprep.mubr.f32.mxu0 0.0
  %604 = vmatmul.mubr.f32.gmra.mrb[0].mxu0 %v472
  %v605 = vpop.f32.mrb[0].mxu0
  %v606 = vadd.f32 0.0, %v605
  %v607 = vpop.f32.mrb[0].mxu0
  %608 = vmatprep.mubr.f32.mxu0 0.0
  %609 = vmatmul.mubr.f32.gmra.mrb[0].mxu0 %v475
  %v610 = vpop.f32.mrb[0].mxu0
  %v611 = vadd.f32 0.0, %v610
  %v612 = vpop.f32.mrb[0].mxu0
  %613 = vmatprep.mubr.f32.mxu0 0.0
  %614 = vmatmul.mubr.f32.gmra.mrb[0].mxu0 %v478
  %v615 = vpop.f32.mrb[0].mxu0
  %v616 = vadd.f32 0.0, %v615
  %v617 = vpop.f32.mrb[0].mxu0
  %618 = vmatprep.mubr.f32.mxu0 0.0
  %619 = vmatmul.mubr.f32.gmra.mrb[0].mxu0 %v481
  %v620 = vpop.f32.mrb[0].mxu0
  %v621 = vadd.f32 0.0, %v620
  %v622 = vpop.f32.mrb[0].mxu0
  %623 = vmatprep.mubr.f32.mxu0 0.0
  %624 = vmatmul.mubr.f32.gmra.mrb[0].mxu0 %v484
  %v625 = vpop.f32.mrb[0].mxu0
  %v626 = vadd.f32 0.0, %v625
  %v627 = vpop.f32.mrb[0].mxu0
  %628 = vmatprep.mubr.f32.mxu0 0.0
  %629 = vmatmul.mubr.f32.gmra.mrb[0].mxu0 %v487
  %v630 = vpop.f32.mrb[0].mxu0
  %v631 = vadd.f32 0.0, %v630
  %v632 = vpop.f32.mrb[0].mxu0
  %633 = vdwg.mxu0
  %v634 = vmul.f32 %v363, %v556
  %v635 = vmul.f32 %v368, %v561
  %v636 = vmul.f32 %v373, %v566
  %v637 = vmul.f32 %v378, %v571
  %v638 = vmul.f32 %v383, %v576
  %v639 = vmul.f32 %v388, %v581
  %v640 = vmul.f32 %v393, %v586
  %v641 = vmul.f32 %v398, %v591
  %v642 = vmul.f32 %v403, %v596
  %v643 = vmul.f32 %v408, %v601
  %v644 = vmul.f32 %v413, %v606
  %v645 = vmul.f32 %v418, %v611
  %v646 = vmul.f32 %v423, %v616
  %v647 = vmul.f32 %v428, %v621
  %v648 = vmul.f32 %v433, %v626
  %v649 = vmul.f32 %v438, %v631
  %vm650 = vcmask 523264
  %v651 = vsel %vm650, %v634, 0.0
  %652 = vadd.xlane.f32.xlu0 %v651
  %v653 = vpop.xlane.xlu0 %652
  %v654 = vsel %vm650, %v635, 0.0
  %655 = vadd.xlane.f32.xlu0 %v654
  %v656 = vpop.xlane.xlu0 %655
  %v657 = vsel %vm650, %v636, 0.0
  %658 = vadd.xlane.f32.xlu0 %v657
  %v659 = vpop.xlane.xlu0 %658
  %v660 = vsel %vm650, %v637, 0.0
  %661 = vadd.xlane.f32.xlu0 %v660
  %v662 = vpop.xlane.xlu0 %661
  %v663 = vsel %vm650, %v638, 0.0
  %664 = vadd.xlane.f32.xlu0 %v663
  %v665 = vpop.xlane.xlu0 %664
  %v666 = vsel %vm650, %v639, 0.0
  %667 = vadd.xlane.f32.xlu0 %v666
  %v668 = vpop.xlane.xlu0 %667
  %v669 = vsel %vm650, %v640, 0.0
  %670 = vadd.xlane.f32.xlu0 %v669
  %v671 = vpop.xlane.xlu0 %670
  %v672 = vsel %vm650, %v641, 0.0
  %673 = vadd.xlane.f32.xlu0 %v672
  %v674 = vpop.xlane.xlu0 %673
  %v675 = vsel %vm650, %v642, 0.0
  %676 = vadd.xlane.f32.xlu0 %v675
  %v677 = vpop.xlane.xlu0 %676
  %v678 = vsel %vm650, %v643, 0.0
  %679 = vadd.xlane.f32.xlu0 %v678
  %v680 = vpop.xlane.xlu0 %679
  %v681 = vsel %vm650, %v644, 0.0
  %682 = vadd.xlane.f32.xlu0 %v681
  %v683 = vpop.xlane.xlu0 %682
  %v684 = vsel %vm650, %v645, 0.0
  %685 = vadd.xlane.f32.xlu0 %v684
  %v686 = vpop.xlane.xlu0 %685
  %v687 = vsel %vm650, %v646, 0.0
  %688 = vadd.xlane.f32.xlu0 %v687
  %v689 = vpop.xlane.xlu0 %688
  %v690 = vsel %vm650, %v647, 0.0
  %691 = vadd.xlane.f32.xlu0 %v690
  %v692 = vpop.xlane.xlu0 %691
  %v693 = vsel %vm650, %v648, 0.0
  %694 = vadd.xlane.f32.xlu0 %v693
  %v695 = vpop.xlane.xlu0 %694
  %v696 = vsel %vm650, %v649, 0.0
  %697 = vadd.xlane.f32.xlu0 %v696
  %v698 = vpop.xlane.xlu0 %697
  %v699 = vld [vmem:[%s2] sm:$0xff]
  %v700 = vld [vmem:[%s2 + $0x8] sm:$0xff]
  %v701 = vld [vmem:[%s2 + $0x10] sm:$0xff]
  %v702 = vld [vmem:[%s2 + $0x18] sm:$0xff]
  %v703 = vld [vmem:[%s2 + $0x20] sm:$0xff]
  %v704 = vld [vmem:[%s2 + $0x28] sm:$0xff]
  %v705 = vld [vmem:[%s2 + $0x30] sm:$0xff]
  %v706 = vld [vmem:[%s2 + $0x38] sm:$0xff]
  %v707 = vld [vmem:[%s2 + $0x40] sm:$0xff]
  %v708 = vld [vmem:[%s2 + $0x48] sm:$0xff]
  %v709 = vld [vmem:[%s2 + $0x50] sm:$0xff]
  %v710 = vld [vmem:[%s2 + $0x58] sm:$0xff]
  %v711 = vld [vmem:[%s2 + $0x60] sm:$0xff]
  %v712 = vld [vmem:[%s2 + $0x68] sm:$0xff]
  %v713 = vld [vmem:[%s2 + $0x70] sm:$0xff]
  %v714 = vld [vmem:[%s2 + $0x78] sm:$0xff]
  %v715 = vmul.f32 %v699, %v653
  %v716 = vmul.f32 %v700, %v656
  %v717 = vmul.f32 %v701, %v659
  %v718 = vmul.f32 %v702, %v662
  %v719 = vmul.f32 %v703, %v665
  %v720 = vmul.f32 %v704, %v668
  %v721 = vmul.f32 %v705, %v671
  %v722 = vmul.f32 %v706, %v674
  %v723 = vmul.f32 %v707, %v677
  %v724 = vmul.f32 %v708, %v680
  %v725 = vmul.f32 %v709, %v683
  %v726 = vmul.f32 %v710, %v686
  %v727 = vmul.f32 %v711, %v689
  %v728 = vmul.f32 %v712, %v692
  %v729 = vmul.f32 %v713, %v695
  %v730 = vmul.f32 %v714, %v698
  %v731 = vsub.f32 0.0, %v715
  %v732 = vsub.f32 0.0, %v716
  %v733 = vsub.f32 0.0, %v717
  %v734 = vsub.f32 0.0, %v718
  %v735 = vsub.f32 0.0, %v719
  %v736 = vsub.f32 0.0, %v720
  %v737 = vsub.f32 0.0, %v721
  %v738 = vsub.f32 0.0, %v722
  %v739 = vsub.f32 0.0, %v723
  %v740 = vsub.f32 0.0, %v724
  %v741 = vsub.f32 0.0, %v725
  %v742 = vsub.f32 0.0, %v726
  %v743 = vsub.f32 0.0, %v727
  %v744 = vsub.f32 0.0, %v728
  %v745 = vsub.f32 0.0, %v729
  %v746 = vsub.f32 0.0, %v730
  %v747 = vmax.f32 %v731, 0.0
  %v748 = vmax.f32 %v732, 0.0
  %v749 = vmax.f32 %v733, 0.0
  %v750 = vmax.f32 %v734, 0.0
  %v751 = vmax.f32 %v735, 0.0
  %v752 = vmax.f32 %v736, 0.0
  %v753 = vmax.f32 %v737, 0.0
  %v754 = vmax.f32 %v738, 0.0
  %v755 = vmax.f32 %v739, 0.0
  %v756 = vmax.f32 %v740, 0.0
  %v757 = vmax.f32 %v741, 0.0
  %v758 = vmax.f32 %v742, 0.0
  %v759 = vmax.f32 %v743, 0.0
  %v760 = vmax.f32 %v744, 0.0
  %v761 = vmax.f32 %v745, 0.0
  %v762 = vmax.f32 %v746, 0.0
  %v763 = vand.u32 2147483647, %v715
  %v764 = vand.u32 2147483647, %v716
  %v765 = vand.u32 2147483647, %v717
  %v766 = vand.u32 2147483647, %v718
  %v767 = vand.u32 2147483647, %v719
  %v768 = vand.u32 2147483647, %v720
  %v769 = vand.u32 2147483647, %v721
  %v770 = vand.u32 2147483647, %v722
  %v771 = vand.u32 2147483647, %v723
  %v772 = vand.u32 2147483647, %v724
  %v773 = vand.u32 2147483647, %v725
  %v774 = vand.u32 2147483647, %v726
  %v775 = vand.u32 2147483647, %v727
  %v776 = vand.u32 2147483647, %v728
  %v777 = vand.u32 2147483647, %v729
  %v778 = vand.u32 2147483647, %v730
  %v779 = vsub.f32 0.0, %v763
  %v780 = vsub.f32 0.0, %v764
  %v781 = vsub.f32 0.0, %v765
  %v782 = vsub.f32 0.0, %v766
  %v783 = vsub.f32 0.0, %v767
  %v784 = vsub.f32 0.0, %v768
  %v785 = vsub.f32 0.0, %v769
  %v786 = vsub.f32 0.0, %v770
  %v787 = vsub.f32 0.0, %v771
  %v788 = vsub.f32 0.0, %v772
  %v789 = vsub.f32 0.0, %v773
  %v790 = vsub.f32 0.0, %v774
  %v791 = vsub.f32 0.0, %v775
  %v792 = vsub.f32 0.0, %v776
  %v793 = vsub.f32 0.0, %v777
  %v794 = vsub.f32 0.0, %v778
  %v795 = vmul.f32 %v779, 1.442695
  %v796 = vpow.pop %v795
  %v797 = vmul.f32 %v780, 1.442695
  %v798 = vpow.pop %v797
  %v799 = vmul.f32 %v781, 1.442695
  %v800 = vpow.pop %v799
  %v801 = vmul.f32 %v782, 1.442695
  %v802 = vpow.pop %v801
  %v803 = vmul.f32 %v783, 1.442695
  %v804 = vpow.pop %v803
  %v805 = vmul.f32 %v784, 1.442695
  %v806 = vpow.pop %v805
  %v807 = vmul.f32 %v785, 1.442695
  %v808 = vpow.pop %v807
  %v809 = vmul.f32 %v786, 1.442695
  %v810 = vpow.pop %v809
  %v811 = vmul.f32 %v787, 1.442695
  %v812 = vpow.pop %v811
  %v813 = vmul.f32 %v788, 1.442695
  %v814 = vpow.pop %v813
  %v815 = vmul.f32 %v789, 1.442695
  %v816 = vpow.pop %v815
  %v817 = vmul.f32 %v790, 1.442695
  %v818 = vpow.pop %v817
  %v819 = vmul.f32 %v791, 1.442695
  %v820 = vpow.pop %v819
  %v821 = vmul.f32 %v792, 1.442695
  %v822 = vpow.pop %v821
  %v823 = vmul.f32 %v793, 1.442695
  %v824 = vpow.pop %v823
  %v825 = vmul.f32 %v794, 1.442695
  %v826 = vpow.pop %v825
  %v827 = vadd.f32 %v796, 1.0
  %v828 = vlog2.pop %v827
  %v829 = vmul.f32 %v828, 0.6931472
  %v830 = vmul.f32 -0.5, %v796
  %v831 = vadd.f32 %v830, 1.0
  %v832 = vmul.f32 %v831, %v796
  %v833 = vand.u32 2147483647, %v796
  %vm834 = vcmp.lt.f32.partialorder %v833, 0.0004427343
  %v835 = vsel %vm834, %v832, %v829
  %v836 = vadd.f32 %v798, 1.0
  %v837 = vlog2.pop %v836
  %v838 = vmul.f32 %v837, 0.6931472
  %v839 = vmul.f32 -0.5, %v798
  %v840 = vadd.f32 %v839, 1.0
  %v841 = vmul.f32 %v840, %v798
  %v842 = vand.u32 2147483647, %v798
  %vm843 = vcmp.lt.f32.partialorder %v842, 0.0004427343
  %v844 = vsel %vm843, %v841, %v838
  %v845 = vadd.f32 %v800, 1.0
  %v846 = vlog2.pop %v845
  %v847 = vmul.f32 %v846, 0.6931472
  %v848 = vmul.f32 -0.5, %v800
  %v849 = vadd.f32 %v848, 1.0
  %v850 = vmul.f32 %v849, %v800
  %v851 = vand.u32 2147483647, %v800
  %vm852 = vcmp.lt.f32.partialorder %v851, 0.0004427343
  %v853 = vsel %vm852, %v850, %v847
  %v854 = vadd.f32 %v802, 1.0
  %v855 = vlog2.pop %v854
  %v856 = vmul.f32 %v855, 0.6931472
  %v857 = vmul.f32 -0.5, %v802
  %v858 = vadd.f32 %v857, 1.0
  %v859 = vmul.f32 %v858, %v802
  %v860 = vand.u32 2147483647, %v802
  %vm861 = vcmp.lt.f32.partialorder %v860, 0.0004427343
  %v862 = vsel %vm861, %v859, %v856
  %v863 = vadd.f32 %v804, 1.0
  %v864 = vlog2.pop %v863
  %v865 = vmul.f32 %v864, 0.6931472
  %v866 = vmul.f32 -0.5, %v804
  %v867 = vadd.f32 %v866, 1.0
  %v868 = vmul.f32 %v867, %v804
  %v869 = vand.u32 2147483647, %v804
  %vm870 = vcmp.lt.f32.partialorder %v869, 0.0004427343
  %v871 = vsel %vm870, %v868, %v865
  %v872 = vadd.f32 %v806, 1.0
  %v873 = vlog2.pop %v872
  %v874 = vmul.f32 %v873, 0.6931472
  %v875 = vmul.f32 -0.5, %v806
  %v876 = vadd.f32 %v875, 1.0
  %v877 = vmul.f32 %v876, %v806
  %v878 = vand.u32 2147483647, %v806
  %vm879 = vcmp.lt.f32.partialorder %v878, 0.0004427343
  %v880 = vsel %vm879, %v877, %v874
  %v881 = vadd.f32 %v808, 1.0
  %v882 = vlog2.pop %v881
  %v883 = vmul.f32 %v882, 0.6931472
  %v884 = vmul.f32 -0.5, %v808
  %v885 = vadd.f32 %v884, 1.0
  %v886 = vmul.f32 %v885, %v808
  %v887 = vand.u32 2147483647, %v808
  %vm888 = vcmp.lt.f32.partialorder %v887, 0.0004427343
  %v889 = vsel %vm888, %v886, %v883
  %v890 = vadd.f32 %v810, 1.0
  %v891 = vlog2.pop %v890
  %v892 = vmul.f32 %v891, 0.6931472
  %v893 = vmul.f32 -0.5, %v810
  %v894 = vadd.f32 %v893, 1.0
  %v895 = vmul.f32 %v894, %v810
  %v896 = vand.u32 2147483647, %v810
  %vm897 = vcmp.lt.f32.partialorder %v896, 0.0004427343
  %v898 = vsel %vm897, %v895, %v892
  %v899 = vadd.f32 %v812, 1.0
  %v900 = vlog2.pop %v899
  %v901 = vmul.f32 %v900, 0.6931472
  %v902 = vmul.f32 -0.5, %v812
  %v903 = vadd.f32 %v902, 1.0
  %v904 = vmul.f32 %v903, %v812
  %v905 = vand.u32 2147483647, %v812
  %vm906 = vcmp.lt.f32.partialorder %v905, 0.0004427343
  %v907 = vsel %vm906, %v904, %v901
  %v908 = vadd.f32 %v814, 1.0
  %v909 = vlog2.pop %v908
  %v910 = vmul.f32 %v909, 0.6931472
  %v911 = vmul.f32 -0.5, %v814
  %v912 = vadd.f32 %v911, 1.0
  %v913 = vmul.f32 %v912, %v814
  %v914 = vand.u32 2147483647, %v814
  %vm915 = vcmp.lt.f32.partialorder %v914, 0.0004427343
  %v916 = vsel %vm915, %v913, %v910
  %v917 = vadd.f32 %v816, 1.0
  %v918 = vlog2.pop %v917
  %v919 = vmul.f32 %v918, 0.6931472
  %v920 = vmul.f32 -0.5, %v816
  %v921 = vadd.f32 %v920, 1.0
  %v922 = vmul.f32 %v921, %v816
  %v923 = vand.u32 2147483647, %v816
  %vm924 = vcmp.lt.f32.partialorder %v923, 0.0004427343
  %v925 = vsel %vm924, %v922, %v919
  %v926 = vadd.f32 %v818, 1.0
  %v927 = vlog2.pop %v926
  %v928 = vmul.f32 %v927, 0.6931472
  %v929 = vmul.f32 -0.5, %v818
  %v930 = vadd.f32 %v929, 1.0
  %v931 = vmul.f32 %v930, %v818
  %v932 = vand.u32 2147483647, %v818
  %vm933 = vcmp.lt.f32.partialorder %v932, 0.0004427343
  %v934 = vsel %vm933, %v931, %v928
  %v935 = vadd.f32 %v820, 1.0
  %v936 = vlog2.pop %v935
  %v937 = vmul.f32 %v936, 0.6931472
  %v938 = vmul.f32 -0.5, %v820
  %v939 = vadd.f32 %v938, 1.0
  %v940 = vmul.f32 %v939, %v820
  %v941 = vand.u32 2147483647, %v820
  %vm942 = vcmp.lt.f32.partialorder %v941, 0.0004427343
  %v943 = vsel %vm942, %v940, %v937
  %v944 = vadd.f32 %v822, 1.0
  %v945 = vlog2.pop %v944
  %v946 = vmul.f32 %v945, 0.6931472
  %v947 = vmul.f32 -0.5, %v822
  %v948 = vadd.f32 %v947, 1.0
  %v949 = vmul.f32 %v948, %v822
  %v950 = vand.u32 2147483647, %v822
  %vm951 = vcmp.lt.f32.partialorder %v950, 0.0004427343
  %v952 = vsel %vm951, %v949, %v946
  %v953 = vadd.f32 %v824, 1.0
  %v954 = vlog2.pop %v953
  %v955 = vmul.f32 %v954, 0.6931472
  %v956 = vmul.f32 -0.5, %v824
  %v957 = vadd.f32 %v956, 1.0
  %v958 = vmul.f32 %v957, %v824
  %v959 = vand.u32 2147483647, %v824
  %vm960 = vcmp.lt.f32.partialorder %v959, 0.0004427343
  %v961 = vsel %vm960, %v958, %v955
  %v962 = vadd.f32 %v826, 1.0
  %v963 = vlog2.pop %v962
  %v964 = vmul.f32 %v963, 0.6931472
  %v965 = vmul.f32 -0.5, %v826
  %v966 = vadd.f32 %v965, 1.0
  %v967 = vmul.f32 %v966, %v826
  %v968 = vand.u32 2147483647, %v826
  %vm969 = vcmp.lt.f32.partialorder %v968, 0.0004427343
  %v970 = vsel %vm969, %v967, %v964
  %v971 = vadd.f32 %v747, %v835
  %v972 = vadd.f32 %v748, %v844
  %v973 = vadd.f32 %v749, %v853
  %v974 = vadd.f32 %v750, %v862
  %v975 = vadd.f32 %v751, %v871
  %v976 = vadd.f32 %v752, %v880
  %v977 = vadd.f32 %v753, %v889
  %v978 = vadd.f32 %v754, %v898
  %v979 = vadd.f32 %v755, %v907
  %v980 = vadd.f32 %v756, %v916
  %v981 = vadd.f32 %v757, %v925
  %v982 = vadd.f32 %v758, %v934
  %v983 = vadd.f32 %v759, %v943
  %v984 = vadd.f32 %v760, %v952
  %v985 = vadd.f32 %v761, %v961
  %v986 = vadd.f32 %v762, %v970
  %v987 = vlaneseq
  %v988 = vshrl.u32 %v987, 7
  %v989 = vadd.s32 %v988, 8
  %v990 = vadd.s32 %v988, 16
  %v991 = vadd.s32 %v988, 24
  %v992 = vadd.s32 %v988, 32
  %v993 = vadd.s32 %v988, 40
  %v994 = vadd.s32 %v988, 48
  %v995 = vadd.s32 %v988, 56
  %v996 = vadd.s32 %v988, 64
  %v997 = vadd.s32 %v988, 72
  %v998 = vadd.s32 %v988, 80
  %v999 = vadd.s32 %v988, 88
  %v1000 = vadd.s32 %v988, 96
  %v1001 = vadd.s32 %v988, 104
  %v1002 = vadd.s32 %v988, 112
  %v1003 = vadd.s32 %v988, 120
  %s1004 = smul.u32 0, 128
  %v1005 = vstv %s1004
  %v1006 = vadd.s32 %v988, %v1005
  %v1007 = vadd.s32 %v989, %v1005
  %v1008 = vadd.s32 %v990, %v1005
  %v1009 = vadd.s32 %v991, %v1005
  %v1010 = vadd.s32 %v992, %v1005
  %v1011 = vadd.s32 %v993, %v1005
  %v1012 = vadd.s32 %v994, %v1005
  %v1013 = vadd.s32 %v995, %v1005
  %v1014 = vadd.s32 %v996, %v1005
  %v1015 = vadd.s32 %v997, %v1005
  %v1016 = vadd.s32 %v998, %v1005
  %v1017 = vadd.s32 %v999, %v1005
  %v1018 = vadd.s32 %v1000, %v1005
  %v1019 = vadd.s32 %v1001, %v1005
  %v1020 = vadd.s32 %v1002, %v1005
  %v1021 = vadd.s32 %v1003, %v1005
  %vm1022 = vcmp.lt.s32.totalorder %v1006, 10
  %vm1023 = vcmp.lt.s32.totalorder %v1007, 10
  %vm1024 = vcmp.lt.s32.totalorder %v1008, 10
  %vm1025 = vcmp.lt.s32.totalorder %v1009, 10
  %vm1026 = vcmp.lt.s32.totalorder %v1010, 10
  %vm1027 = vcmp.lt.s32.totalorder %v1011, 10
  %vm1028 = vcmp.lt.s32.totalorder %v1012, 10
  %vm1029 = vcmp.lt.s32.totalorder %v1013, 10
  %vm1030 = vcmp.lt.s32.totalorder %v1014, 10
  %vm1031 = vcmp.lt.s32.totalorder %v1015, 10
  %vm1032 = vcmp.lt.s32.totalorder %v1016, 10
  %vm1033 = vcmp.lt.s32.totalorder %v1017, 10
  %vm1034 = vcmp.lt.s32.totalorder %v1018, 10
  %vm1035 = vcmp.lt.s32.totalorder %v1019, 10
  %vm1036 = vcmp.lt.s32.totalorder %v1020, 10
  %vm1037 = vcmp.lt.s32.totalorder %v1021, 10
  %v1038 = vsel %vm1022, %v971, 0.0
  %v1039 = vsel %vm1023, %v972, 0.0
  %v1040 = vsel %vm1024, %v973, 0.0
  %v1041 = vsel %vm1025, %v974, 0.0
  %v1042 = vsel %vm1026, %v975, 0.0
  %v1043 = vsel %vm1027, %v976, 0.0
  %v1044 = vsel %vm1028, %v977, 0.0
  %v1045 = vsel %vm1029, %v978, 0.0
  %v1046 = vsel %vm1030, %v979, 0.0
  %v1047 = vsel %vm1031, %v980, 0.0
  %v1048 = vsel %vm1032, %v981, 0.0
  %v1049 = vsel %vm1033, %v982, 0.0
  %v1050 = vsel %vm1034, %v983, 0.0
  %v1051 = vsel %vm1035, %v984, 0.0
  %v1052 = vsel %vm1036, %v985, 0.0
  %v1053 = vsel %vm1037, %v986, 0.0
  %vm1054 = vcmask 7168
  %1055 = vst.msk [vmem:[%s4] sm:$0xff] %vm1054, %v1038
  %1056 = vst.msk [vmem:[%s4 + $0x8] sm:$0xff] %vm1054, %v1039
  %1057 = vst.msk [vmem:[%s4 + $0x10] sm:$0xff] %vm1054, %v1040
  %1058 = vst.msk [vmem:[%s4 + $0x18] sm:$0xff] %vm1054, %v1041
  %1059 = vst.msk [vmem:[%s4 + $0x20] sm:$0xff] %vm1054, %v1042
  %1060 = vst.msk [vmem:[%s4 + $0x28] sm:$0xff] %vm1054, %v1043
  %1061 = vst.msk [vmem:[%s4 + $0x30] sm:$0xff] %vm1054, %v1044
  %1062 = vst.msk [vmem:[%s4 + $0x38] sm:$0xff] %vm1054, %v1045
  %1063 = vst.msk [vmem:[%s4 + $0x40] sm:$0xff] %vm1054, %v1046
  %1064 = vst.msk [vmem:[%s4 + $0x48] sm:$0xff] %vm1054, %v1047
  %1065 = vst.msk [vmem:[%s4 + $0x50] sm:$0xff] %vm1054, %v1048
  %1066 = vst.msk [vmem:[%s4 + $0x58] sm:$0xff] %vm1054, %v1049
  %1067 = vst.msk [vmem:[%s4 + $0x60] sm:$0xff] %vm1054, %v1050
  %1068 = vst.msk [vmem:[%s4 + $0x68] sm:$0xff] %vm1054, %v1051
  %1069 = vst.msk [vmem:[%s4 + $0x70] sm:$0xff] %vm1054, %v1052
  %1070 = vst.msk [vmem:[%s4 + $0x78] sm:$0xff] %vm1054, %v1053
  // Predicated region
  $region18: #{line1st_loss.1} parent=0 // pred_check
    _
  $region19: #{line1st_loss.1} parent=0 // pred_check_branch
    %1072 = sbr.rel (0) target = $region21
  $region20: #{line1st_loss.1} parent=0 // pred_region
    _
  $region21: #{line1st_loss.1} parent=0 // pred_fallthru
    _
  // Predicated region
  $region22: #{line1st_loss.1} parent=0 // pred_check
    _
  $region23: #{line1st_loss.1} parent=0 // pred_check_branch
    %1074 = sbr.rel (0) target = $region25
  $region24: #{line1st_loss.1} parent=0 // pred_region
    _
  $region25: #{line1st_loss.1} parent=0 // pred_fallthru
    _

</llo_original>
